<compile_context>
chip_gen: v6e
topology: v6e:2x2x1
jax: 0.10.0
libtpu: 0.0.40
codegen_flags: <defaults>
</compile_context>

<pallas_src>
import jax
import jax.numpy as jnp
from jax import lax
from jax.experimental import pallas as pl
from jax.experimental.pallas import tpu as pltpu

BN_EPS = 1e-5


def _round_up(n, m):
    return ((n + m - 1) // m) * m


def _default_vmem_limit_bytes():
    """~80% of physical VMEM: leaves headroom for compiler scratch/pipelining."""
    cap = 64 * 1024 * 1024            # conservative fallback
    try:
        info = pltpu.get_tpu_info()
        cap = int(getattr(info, "vmem_capacity_bytes", cap))
    except Exception:
        pass
    return int(cap * 0.8)


def mlp_head_kernel(x_ref, w1_ref, gb_ref, w2_ref, b2_ref, o_ref):
    """One (core-split, H-tile) step: Linear1 -> BN(batch stats) -> ReLU -> partial Linear2."""
    c = pl.program_id(0)              # core-split index ("parallel")
    k = pl.program_id(1)              # H-tile index within this split ("arbitrary")

    @pl.when(k == 0)
    def _init():
        # Output block is resident across the H reduction; seed it with the
        # Linear2 bias on split 0 only (the cross-split sum then adds it once).
        bias_row = b2_ref[...] * (c == 0).astype(jnp.float32)       # (1, Pp)
        o_ref[...] = jnp.broadcast_to(bias_row, o_ref.shape)

    # ---- Linear1 for this H-tile (bf16 operands -> f32 accumulation on MXU).
    # The Linear1 bias is intentionally omitted: BatchNorm's mean subtraction
    # cancels it exactly (training-mode statistics).
    h = jnp.dot(x_ref[...], w1_ref[...], preferred_element_type=jnp.float32)

    # ---- BatchNorm1d training-mode statistics, single pass (biased 1/N).
    inv_b = 1.0 / x_ref.shape[0]
    mean = jnp.sum(h, axis=0, keepdims=True) * inv_b                # (1, TH)
    ex2 = jnp.sum(h * h, axis=0, keepdims=True) * inv_b             # (1, TH)
    var = ex2 - mean * mean
    gamma = gb_ref[0:1, :]                                          # (1, TH)
    beta = gb_ref[1:2, :]                                           # (1, TH)
    scale = gamma * lax.rsqrt(var + BN_EPS)
    shift = beta - mean * scale

    # ---- Folded normalize + affine + ReLU: one FMA + one max on (B, TH).
    h = jnp.maximum(h * scale + shift, 0.0)

    # ---- Partial Linear2, accumulated directly into the resident output.
    o_ref[...] += jnp.dot(h.astype(jnp.bfloat16), w2_ref[...],
                          preferred_element_type=jnp.float32)


def prepare_mlp_head_params(w1, gamma, beta, w2, b2, *, block_h=None,
                            core_splits=1, vmem_limit_bytes=None):
    """Pad + cast the parameters ONCE (hoisted out of the per-call path).

    w1: (Cin, H), w2: (H, P)   (transposed vs PyTorch's (out, in)).
    The Linear1 bias is not needed: BatchNorm cancels it exactly.
    """
    Cin, H = w1.shape
    P = w2.shape[1]

    if vmem_limit_bytes is None:
        vmem_limit_bytes = _default_vmem_limit_bytes()
    if block_h is None:
        # Fatter H-tiles on 128-MiB parts (v5e/v6e); smaller on v7x (64 MiB).
        block_h = 1024 if vmem_limit_bytes >= 96 * 1024 * 1024 else 256

    cin_p = _round_up(Cin, 128)
    p_p = _round_up(P, 128)
    th = min(_round_up(block_h, 128), _round_up(H, 128))
    h_p = _round_up(H, th * core_splits)
    n_tiles = h_p // th
    tiles_per_split = n_tiles // core_splits

    gamma = jnp.reshape(gamma, (1, H)).astype(jnp.float32)
    beta = jnp.reshape(beta, (1, H)).astype(jnp.float32)
    b2 = jnp.reshape(b2, (1, P)).astype(jnp.float32)

    # Exact padding (see module docstring for why).
    w1_p = jnp.pad(w1, ((0, cin_p - Cin), (0, h_p - H))).astype(jnp.bfloat16)
    gamma_p = jnp.pad(gamma, ((0, 0), (0, h_p - H)), constant_values=1.0)
    beta_p = jnp.pad(beta, ((0, 0), (0, h_p - H)))
    gb_p = jnp.concatenate([gamma_p, beta_p], axis=0)               # (2, H_pad)
    w2_p = jnp.pad(w2, ((0, h_p - H), (0, p_p - P))).astype(jnp.bfloat16)
    b2_p = jnp.pad(b2, ((0, 0), (0, p_p - P)))

    return {
        "w1": w1_p, "gb": gb_p, "w2": w2_p, "b2": b2_p,
        "meta": {
            "Cin": Cin, "P": P, "cin_p": cin_p, "p_p": p_p, "th": th,
            "tiles_per_split": tiles_per_split, "core_splits": core_splits,
            "vmem_limit_bytes": int(vmem_limit_bytes),
        },
    }


def mlp_head_apply(x, params):
    """Fused MLPHead forward on pre-prepared parameters. x: (B, Cin) float."""
    m = params["meta"]
    B, Cin = x.shape
    assert Cin == m["Cin"], "x feature dim does not match prepared params"
    cin_p, p_p, th = m["cin_p"], m["p_p"], m["th"]
    tps, cs = m["tiles_per_split"], m["core_splits"]

    # x is cast to bf16 ONCE here (not per grid step) and padded lane-dense.
    x_p = jnp.pad(x, ((0, 0), (0, cin_p - Cin))).astype(jnp.bfloat16)

    out = pl.pallas_call(
        mlp_head_kernel,
        out_shape=jax.ShapeDtypeStruct((cs, B, p_p), jnp.float32),
        grid_spec=pltpu.PrefetchScalarGridSpec(
            num_scalar_prefetch=0,
            grid=(cs, tps),
            in_specs=[
                pl.BlockSpec((B, cin_p), lambda c, k: (0, 0)),             # x (resident)
                pl.BlockSpec((cin_p, th), lambda c, k: (0, c * tps + k)),  # w1 H-tile
                pl.BlockSpec((2, th), lambda c, k: (0, c * tps + k)),      # gamma/beta tile
                pl.BlockSpec((th, p_p), lambda c, k: (c * tps + k, 0)),    # w2 H-tile
                pl.BlockSpec((1, p_p), lambda c, k: (0, 0)),               # b2 (resident)
            ],
            out_specs=pl.BlockSpec((None, B, p_p), lambda c, k: (c, 0, 0)),
        ),
        compiler_params=pltpu.CompilerParams(
            dimension_semantics=("parallel", "arbitrary"),   # H is a reduction
            vmem_limit_bytes=m["vmem_limit_bytes"],
        ),
    )(x_p, params["w1"], params["gb"], params["w2"], params["b2"])

    out = out[0] if cs == 1 else jnp.sum(out, axis=0)   # combine core-split partials
    return out[:, :m["P"]]


def mlp_head(x, w1, b1, gamma, beta, w2, b2, *, block_h=None, core_splits=1):
    """Convenience wrapper (prepares params every call; prefer prepare+apply).

    b1 is accepted for API parity with nn.Linear(bias=True) but is unused:
    BatchNorm's mean subtraction cancels it exactly.
    """
    del b1
    params = prepare_mlp_head_params(w1, gamma, beta, w2, b2,
                                     block_h=block_h, core_splits=core_splits)
    return mlp_head_apply(x, params)


def reference(x, w1, b1, gamma, beta, w2, b2):
    """Pure-JAX f32 reference matching PyTorch training-mode semantics (keeps b1)."""
    h = x @ w1 + jnp.reshape(b1, (1, -1))
    mean = jnp.mean(h, axis=0, keepdims=True)
    var = jnp.mean((h - mean) ** 2, axis=0, keepdims=True)
    h = (h - mean) / jnp.sqrt(var + BN_EPS)
    h = h * jnp.reshape(gamma, (1, -1)) + jnp.reshape(beta, (1, -1))
    h = jnp.maximum(h, 0.0)
    return h @ w2 + jnp.reshape(b2, (1, -1))


if __name__ == "__main__":
    # Small shapes consistent with the module: Linear(Cin->H), BN(H), Linear(H->P).
    # block_h=128 gives 2 H-tiles so the in-place output accumulation is exercised.
    B, Cin, H, P = 16, 128, 256, 32

    key = jax.random.PRNGKey(0)
    kx, kw1, kb1, kg, kbeta, kw2, kb2 = jax.random.split(key, 7)

    x = jax.random.normal(kx, (B, Cin), dtype=jnp.float32)
    w1 = jax.random.normal(kw1, (Cin, H), dtype=jnp.float32) * (1.0 / jnp.sqrt(Cin))
    b1 = 0.1 * jax.random.normal(kb1, (1, H), dtype=jnp.float32)
    gamma = 1.0 + 0.1 * jax.random.normal(kg, (1, H), dtype=jnp.float32)
    beta = 0.1 * jax.random.normal(kbeta, (1, H), dtype=jnp.float32)
    w2 = jax.random.normal(kw2, (H, P), dtype=jnp.float32) * (1.0 / jnp.sqrt(H))
    b2 = 0.1 * jax.random.normal(kb2, (1, P), dtype=jnp.float32)

    ref = reference(x, w1, b1, gamma, beta, w2, b2)

    # Single core-split (v5e/v6e default path).
    params1 = prepare_mlp_head_params(w1, gamma, beta, w2, b2,
                                      block_h=128, core_splits=1)
    out1 = jax.block_until_ready(mlp_head_apply(x, params1))
    assert out1.shape == (B, P)
    assert jnp.allclose(out1, ref, atol=5e-2, rtol=5e-2), (
        "core_splits=1 mismatch, max abs err = "
        f"{float(jnp.max(jnp.abs(out1 - ref)))}")

    # Two-way H split across the leading 'parallel' axis (v7x megacore path;
    # also correct, just slightly redundant, on single-TensorCore chips).
    params2 = prepare_mlp_head_params(w1, gamma, beta, w2, b2,
                                      block_h=128, core_splits=2)
    out2 = jax.block_until_ready(mlp_head_apply(x, params2))
    assert jnp.allclose(out2, ref, atol=5e-2, rtol=5e-2), (
        "core_splits=2 mismatch, max abs err = "
        f"{float(jnp.max(jnp.abs(out2 - ref)))}")

    print("KERNEL_OK")
</pallas_src>

<mosaic_0001>
module attributes {stable_mosaic.version = 11 : i64} {
  func.func @mlp_head_kernel(%arg0: i32, %arg1: i32, %arg2: memref<16x128xbf16, #tpu.memory_space<vmem>>, %arg3: memref<128x128xbf16, #tpu.memory_space<vmem>>, %arg4: memref<2x128xf32, #tpu.memory_space<vmem>>, %arg5: memref<128x128xbf16, #tpu.memory_space<vmem>>, %arg6: memref<1x128xf32, #tpu.memory_space<vmem>>, %arg7: memref<1x16x128xf32, #tpu.memory_space<vmem>>) attributes {dimension_semantics = [#tpu.dimension_semantics<parallel>, #tpu.dimension_semantics<arbitrary>], iteration_bounds = array<i64: 1, 2>, scalar_prefetch = 0 : i64, scratch_operands = 0 : i64, tpu.core_type = #tpu.core_type<tc>, window_params = [{pipeline_mode = #tpu.pipeline_mode<synchronous>, transform_indices = @transform_0, window_bounds = array<i64: 16, 128>}, {transform_indices = @transform_1, window_bounds = array<i64: 128, 128>}, {transform_indices = @transform_2, window_bounds = array<i64: 2, 128>}, {transform_indices = @transform_3, window_bounds = array<i64: 128, 128>}, {pipeline_mode = #tpu.pipeline_mode<synchronous>, transform_indices = @transform_4, window_bounds = array<i64: 1, 128>}, {transform_indices = @transform_5, window_bounds = array<i64: 1, 16, 128>}]} {
    %c0_i32 = arith.constant 0 : i32
    %0 = arith.cmpi eq, %arg1, %c0_i32 : i32
    %1 = arith.extui %0 : i1 to i32
    %c0_i32_0 = arith.constant 0 : i32
    %2 = arith.cmpi ne, %1, %c0_i32_0 : i32
    scf.if %2 {
      %c0_22 = arith.constant 0 : index
      %c0_23 = arith.constant 0 : index
      %40 = vector.load %arg6[%c0_22, %c0_23] : memref<1x128xf32, #tpu.memory_space<vmem>>, vector<1x128xf32>
      %c0_i32_24 = arith.constant 0 : i32
      %41 = arith.cmpi eq, %arg0, %c0_i32_24 : i32
      %42 = arith.extui %41 : i1 to i32
      %43 = arith.sitofp %42 : i32 to f32
      %44 = vector.broadcast %43 : f32 to vector<1x128xf32>
      %45 = arith.mulf %40, %44 : vector<1x128xf32>
      %46 = vector.shape_cast %45 : vector<1x128xf32> to vector<1x128xf32>
      %47 = vector.broadcast %46 : vector<1x128xf32> to vector<16x128xf32>
      %c0_25 = arith.constant 0 : index
      %c0_26 = arith.constant 0 : index
      %c0_27 = arith.constant 0 : index
      %48 = vector.load %arg7[%c0_25, %c0_26, %c0_27] : memref<1x16x128xf32, #tpu.memory_space<vmem>>, vector<1x16x128xf32>
      %49 = vector.shape_cast %48 : vector<1x16x128xf32> to vector<16x128xf32>
      %50 = vector.shape_cast %47 : vector<16x128xf32> to vector<1x16x128xf32>
      tpu.vector_store %arg7[%c0_25, %c0_26, %c0_27], %50 {strides = array<i32>} : memref<1x16x128xf32, #tpu.memory_space<vmem>>, vector<1x16x128xf32>,
    } else {
    }
    %c0 = arith.constant 0 : index
    %c0_1 = arith.constant 0 : index
    %3 = vector.load %arg2[%c0, %c0_1] : memref<16x128xbf16, #tpu.memory_space<vmem>>, vector<16x128xbf16>
    %c0_2 = arith.constant 0 : index
    %c0_3 = arith.constant 0 : index
    %4 = vector.load %arg3[%c0_2, %c0_3] : memref<128x128xbf16, #tpu.memory_space<vmem>>, vector<128x128xbf16>
    %cst = arith.constant dense<0.000000e+00> : vector<16x128xf32>
    %5 = tpu.matmul %3, %4, %cst {dimension_numbers = #tpu.dot_dimension_numbers<[1], [0], [0], [1], [0, 0, 1, 1], [], []>} : vector<16x128xbf16>, vector<128x128xbf16>, vector<16x128xf32> -> vector<16x128xf32>
    %cst_4 = arith.constant dense<0.000000e+00> : vector<128xf32>
    %6 = vector.multi_reduction <add>, %5, %cst_4 [0] : vector<16x128xf32> to vector<128xf32>
    %7 = vector.shape_cast %6 : vector<128xf32> to vector<1x128xf32>
    %cst_5 = arith.constant 6.250000e-02 : f32
    %8 = vector.broadcast %cst_5 : f32 to vector<1x128xf32>
    %9 = arith.mulf %7, %8 : vector<1x128xf32>
    %10 = arith.mulf %5, %5 : vector<16x128xf32>
    %cst_6 = arith.constant dense<0.000000e+00> : vector<128xf32>
    %11 = vector.multi_reduction <add>, %10, %cst_6 [0] : vector<16x128xf32> to vector<128xf32>
    %12 = vector.shape_cast %11 : vector<128xf32> to vector<1x128xf32>
    %cst_7 = arith.constant 6.250000e-02 : f32
    %13 = vector.broadcast %cst_7 : f32 to vector<1x128xf32>
    %14 = arith.mulf %12, %13 : vector<1x128xf32>
    %15 = arith.mulf %9, %9 : vector<1x128xf32>
    %16 = arith.subf %14, %15 : vector<1x128xf32>
    %c0_8 = arith.constant 0 : index
    %c0_9 = arith.constant 0 : index
    %17 = vector.load %arg4[%c0_8, %c0_9] : memref<2x128xf32, #tpu.memory_space<vmem>>, vector<1x128xf32>
    %c1 = arith.constant 1 : index
    %c0_10 = arith.constant 0 : index
    %18 = vector.load %arg4[%c1, %c0_10] : memref<2x128xf32, #tpu.memory_space<vmem>>, vector<1x128xf32>
    %cst_11 = arith.constant 9.99999974E-6 : f32
    %19 = vector.broadcast %cst_11 : f32 to vector<1x128xf32>
    %20 = arith.addf %16, %19 : vector<1x128xf32>
    %21 = math.rsqrt %20 : vector<1x128xf32>
    %22 = arith.mulf %17, %21 : vector<1x128xf32>
    %23 = arith.mulf %9, %22 : vector<1x128xf32>
    %24 = arith.subf %18, %23 : vector<1x128xf32>
    %25 = vector.broadcast %22 : vector<1x128xf32> to vector<16x128xf32>
    %26 = arith.mulf %5, %25 : vector<16x128xf32>
    %27 = vector.broadcast %24 : vector<1x128xf32> to vector<16x128xf32>
    %28 = arith.addf %26, %27 : vector<16x128xf32>
    %cst_12 = arith.constant 0.000000e+00 : f32
    %29 = vector.broadcast %cst_12 : f32 to vector<16x128xf32>
    %30 = arith.maximumf %28, %29 : vector<16x128xf32>
    %c0_13 = arith.constant 0 : index
    %c0_14 = arith.constant 0 : index
    %c0_15 = arith.constant 0 : index
    %31 = vector.load %arg7[%c0_13, %c0_14, %c0_15] : memref<1x16x128xf32, #tpu.memory_space<vmem>>, vector<1x16x128xf32>
    %32 = vector.shape_cast %31 : vector<1x16x128xf32> to vector<16x128xf32>
    %33 = arith.truncf %30 : vector<16x128xf32> to vector<16x128xbf16>
    %c0_16 = arith.constant 0 : index
    %c0_17 = arith.constant 0 : index
    %34 = vector.load %arg5[%c0_16, %c0_17] : memref<128x128xbf16, #tpu.memory_space<vmem>>, vector<128x128xbf16>
    %cst_18 = arith.constant dense<0.000000e+00> : vector<16x128xf32>
    %35 = tpu.matmul %33, %34, %cst_18 {dimension_numbers = #tpu.dot_dimension_numbers<[1], [0], [0], [1], [0, 0, 1, 1], [], []>} : vector<16x128xbf16>, vector<128x128xbf16>, vector<16x128xf32> -> vector<16x128xf32>
    %36 = arith.addf %32, %35 : vector<16x128xf32>
    %c0_19 = arith.constant 0 : index
    %c0_20 = arith.constant 0 : index
    %c0_21 = arith.constant 0 : index
    %37 = vector.load %arg7[%c0_19, %c0_20, %c0_21] : memref<1x16x128xf32, #tpu.memory_space<vmem>>, vector<1x16x128xf32>
    %38 = vector.shape_cast %37 : vector<1x16x128xf32> to vector<16x128xf32>
    %39 = vector.shape_cast %36 : vector<16x128xf32> to vector<1x16x128xf32>
    tpu.vector_store %arg7[%c0_19, %c0_20, %c0_21], %39 {strides = array<i32>} : memref<1x16x128xf32, #tpu.memory_space<vmem>>, vector<1x16x128xf32>,
    return
  }
  func.func @transform_0(%arg0: i32, %arg1: i32) -> (i32, i32) {
    %c0_i32 = arith.constant 0 : i32
    %c0_i32_0 = arith.constant 0 : i32
    %c0_i32_1 = arith.constant 0 : i32
    return %c0_i32, %c0_i32_0 : i32, i32
  }
  func.func @transform_1(%arg0: i32, %arg1: i32) -> (i32, i32) {
    %c2_i32 = arith.constant 2 : i32
    %0 = arith.muli %arg0, %c2_i32 : i32
    %1 = arith.addi %0, %arg1 : i32
    %c0_i32 = arith.constant 0 : i32
    %c0_i32_0 = arith.constant 0 : i32
    return %c0_i32, %1 : i32, i32
  }
  func.func @transform_2(%arg0: i32, %arg1: i32) -> (i32, i32) {
    %c2_i32 = arith.constant 2 : i32
    %0 = arith.muli %arg0, %c2_i32 : i32
    %1 = arith.addi %0, %arg1 : i32
    %c0_i32 = arith.constant 0 : i32
    %c0_i32_0 = arith.constant 0 : i32
    return %c0_i32, %1 : i32, i32
  }
  func.func @transform_3(%arg0: i32, %arg1: i32) -> (i32, i32) {
    %c2_i32 = arith.constant 2 : i32
    %0 = arith.muli %arg0, %c2_i32 : i32
    %1 = arith.addi %0, %arg1 : i32
    %c0_i32 = arith.constant 0 : i32
    %c0_i32_0 = arith.constant 0 : i32
    return %1, %c0_i32 : i32, i32
  }
  func.func @transform_4(%arg0: i32, %arg1: i32) -> (i32, i32) {
    %c0_i32 = arith.constant 0 : i32
    %c0_i32_0 = arith.constant 0 : i32
    %c0_i32_1 = arith.constant 0 : i32
    return %c0_i32, %c0_i32_0 : i32, i32
  }
  func.func @transform_5(%arg0: i32, %arg1: i32) -> (i32, i32, i32) {
    %c0_i32 = arith.constant 0 : i32
    %c0_i32_0 = arith.constant 0 : i32
    %c0_i32_1 = arith.constant 0 : i32
    return %arg0, %c0_i32, %c0_i32_0 : i32, i32, i32
  }
}

</mosaic_0001>

<llo_original>
// kernel: tpu_custom_call.1
$region0: #{tpu_custom_call.1}
  #allocation0 [shape = 'u32[]', space=smem, size = 0x4, offset = 0x4, fixed_abs, tag = 'smem constant byte address 0x4 - core index']
  #allocation1 [shape = 'u32[144,128]{1,0:T(1,128)}', space=vmem, size = 0x12000, scoped, tag = 'internal scratch']
  %s0 = inlined_call_operand.hbm [shape: bf16[16,128], index: 0, kind: input, shape index: {}]
  %s1 = inlined_call_operand.hbm [shape: bf16[128,256], index: 1, kind: input, shape index: {}]
  %s2 = inlined_call_operand.hbm [shape: f32[2,256], index: 2, kind: input, shape index: {}]
  %s3 = inlined_call_operand.hbm [shape: bf16[256,128], index: 3, kind: input, shape index: {}]
  %s4 = inlined_call_operand.vmem [shape: f32[1,128], index: 4, kind: input, shape index: {}]
  %s5 = inlined_call_operand.hbm [shape: f32[1,16,128], index: 5, kind: output, shape index: {}]
  %s6 = sld [smem:[#allocation0]]
  $region73: #{tpu_custom_call.1} parent=0
    _
  %s8 = ssub.s32 1, %s6
  %s9 = scalar_select 0, %s8, %s6
  $region1: #{tpu_custom_call.1} parent=0
    #allocation2 [shape = 'u8[4096]{0}', space=vmem, size = 0x1000, scoped, tag = 'input window, operand 0, single buffered']
    #allocation3 [shape = 's32[2]{0}', space=sflag, size = 0x8, scoped, tag = 'scoped memory for tpu_custom_call.1']
    #allocation4 [shape = 's32[2]{0}', space=sflag, size = 0x8, scoped, tag = 'scoped memory for tpu_custom_call.1']
    #allocation5 [shape = 'u8[65536]{0}', space=vmem, size = 0x10000, scoped, tag = 'input window, operand 1']
    #allocation6 [shape = 's32[2]{0}', space=sflag, size = 0x8, scoped, tag = 'scoped memory for tpu_custom_call.1']
    #allocation7 [shape = 'u8[2048]{0}', space=vmem, size = 0x800, scoped, tag = 'input window, operand 2']
    #allocation8 [shape = 'u8[65536]{0}', space=vmem, size = 0x10000, scoped, tag = 'input window, operand 3']
    #allocation9 [shape = 's32[2]{0}', space=sflag, size = 0x8, scoped, tag = 'scoped memory for tpu_custom_call.1']
    #allocation10 [shape = 'u8[8192]{0}', space=vmem, size = 0x2000, scoped, tag = 'output window, operand 0, single buffered']
    %10 = vsyncpa [#allocation3], 0
    %11 = vsyncpa [#allocation6], 0
    %s12 = scalar_lea.sflag [#allocation6], 1
    %13 = vsyncpa %s12, 0
    %14 = vsyncpa [#allocation9], 0
    %s15 = scalar_lea.sflag [#allocation9], 1
    %16 = vsyncpa %s15, 0
    %17 = vsyncpa [#allocation4], 0
    loop: start=0, step=1, limit=4
    $region2: #{tpu_custom_call.1} parent=1 // loop_pre_header
      _
    $region3: #{tpu_custom_call.1} parent=1 // loop_header
      %s19 = sphi 0, %s23
      %p20 = scmp.ge.s32.totalorder %s19, 4
      %s26 = sphi 0, %s38
      %s27 = sphi 0, %s34
      %s28 = sphi 0, %s26
      %s29 = sphi 0, %s27
      %s30 = sphi 0, %s28
      %s31 = sphi 0, %s29
      %s39 = sphi 0, %s39
      %s41 = sphi 0, %s39
      %s42 = sphi 0, %s41
      %s56 = sphi 0, %s42
      %s66 = sphi 0, %s68
      %s69 = sphi 0, %s66
      %s70 = sphi 0, %s69
      %s86 = sphi 0, %s70
      %s96 = sphi 0, %s98
      %s99 = sphi 0, %s96
      %s100 = sphi 0, %s99
      %s116 = sphi 0, %s100
      %s126 = sphi 0, %s128
      %s129 = sphi 0, %s126
      %s130 = sphi 0, %s129
      %s146 = sphi 0, %s130
      %s150 = sphi 0, %s150
      %s152 = sphi 0, %s150
      %s153 = sphi 0, %s152
      %s167 = sphi 0, %s153
      %s173 = sphi 0, %s175
      %s176 = sphi 0, %s173
      %s177 = sphi 0, %s176
      %s193 = sphi 0, %s177
    $region4: #{tpu_custom_call.1} parent=1 // loop_header_branch
      %22 = sbr.rel (%p20) target = $region8
    $region5: #{tpu_custom_call.1} parent=1 // loop_body
      %s24 = ssub.s32 %s19, 1
      %s25 = ssub.s32 %s19, 2
      %s32 = sadd.s32 1, %s27
      %p33 = scmp.ge.s32.totalorder %s32, 2
      %s34 = scalar_select %p33, 0, %s32
      %s35 = sadd.s32 1, %s26
      %s36 = scalar_select %p33, %s35, %s26
      %p37 = scmp.ge.s32.totalorder %s36, 1
      %s38 = scalar_select %p37, 0, %s36
      %s40 = sadd.s32 %s39, 1
      %p43 = scmp.eq.s32.totalorder %s19, 1
      %p44 = scmp.ne.s32.totalorder %s39, %s41
      %p45 = scmp.eq.s32.totalorder %s19, 0
      %p46 = por %p44, %p45
      %p47 = scmp.ne.s32.totalorder %s39, %s41
      %p48 = scmp.eq.s32.totalorder %s24, 1
      %p49 = por %p47, %p48
      %p50 = scmp.ne.s32.totalorder %s41, %s42
      %p51 = scmp.eq.s32.totalorder %s24, 0
      %p52 = por %p50, %p51
      %p53 = scmp.ne.s32.totalorder %s41, %s42
      %p54 = scmp.eq.s32.totalorder %s25, 1
      %p55 = por %p53, %p54
      %p57 = scmp.ne.s32.totalorder %s42, %s56
      %p58 = scmp.eq.s32.totalorder %s25, 0
      %p59 = por %p57, %p58
      %s60 = smul.u32 %s26, 2
      %s61 = sadd.s32 %s60, %s27
      %s62 = smul.u32 %s38, 2
      %s63 = sadd.s32 %s62, %s34
      %s64 = ssub.s32 %s61, %s63
      %p65 = scmp.eq.s32.totalorder %s64, 0
      %s67 = sadd.s32 %s66, 1
      %s68 = scalar_select %p65, %s66, %s67
      %p71 = pneg %p65
      %p72 = scmp.eq.s32.totalorder %s19, 1
      %p73 = por %p71, %p72
      %p74 = scmp.ne.s32.totalorder %s66, %s69
      %p75 = scmp.eq.s32.totalorder %s19, 0
      %p76 = por %p74, %p75
      %p77 = scmp.ne.s32.totalorder %s66, %s69
      %p78 = scmp.eq.s32.totalorder %s24, 1
      %p79 = por %p77, %p78
      %p80 = scmp.ne.s32.totalorder %s69, %s70
      %p81 = scmp.eq.s32.totalorder %s24, 0
      %p82 = por %p80, %p81
      %p83 = scmp.ne.s32.totalorder %s69, %s70
      %p84 = scmp.eq.s32.totalorder %s25, 1
      %p85 = por %p83, %p84
      %p87 = scmp.ne.s32.totalorder %s70, %s86
      %p88 = scmp.eq.s32.totalorder %s25, 0
      %p89 = por %p87, %p88
      %s90 = smul.u32 %s26, 2
      %s91 = sadd.s32 %s90, %s27
      %s92 = smul.u32 %s38, 2
      %s93 = sadd.s32 %s92, %s34
      %s94 = ssub.s32 %s91, %s93
      %p95 = scmp.eq.s32.totalorder %s94, 0
      %s97 = sadd.s32 %s96, 1
      %s98 = scalar_select %p95, %s96, %s97
      %p101 = pneg %p95
      %p102 = scmp.eq.s32.totalorder %s19, 1
      %p103 = por %p101, %p102
      %p104 = scmp.ne.s32.totalorder %s96, %s99
      %p105 = scmp.eq.s32.totalorder %s19, 0
      %p106 = por %p104, %p105
      %p107 = scmp.ne.s32.totalorder %s96, %s99
      %p108 = scmp.eq.s32.totalorder %s24, 1
      %p109 = por %p107, %p108
      %p110 = scmp.ne.s32.totalorder %s99, %s100
      %p111 = scmp.eq.s32.totalorder %s24, 0
      %p112 = por %p110, %p111
      %p113 = scmp.ne.s32.totalorder %s99, %s100
      %p114 = scmp.eq.s32.totalorder %s25, 1
      %p115 = por %p113, %p114
      %p117 = scmp.ne.s32.totalorder %s100, %s116
      %p118 = scmp.eq.s32.totalorder %s25, 0
      %p119 = por %p117, %p118
      %s120 = smul.u32 %s26, 2
      %s121 = sadd.s32 %s120, %s27
      %s122 = smul.u32 %s38, 2
      %s123 = sadd.s32 %s122, %s34
      %s124 = ssub.s32 %s121, %s123
      %p125 = scmp.eq.s32.totalorder %s124, 0
      %s127 = sadd.s32 %s126, 1
      %s128 = scalar_select %p125, %s126, %s127
      %p131 = pneg %p125
      %p132 = scmp.eq.s32.totalorder %s19, 1
      %p133 = por %p131, %p132
      %p134 = scmp.ne.s32.totalorder %s126, %s129
      %p135 = scmp.eq.s32.totalorder %s19, 0
      %p136 = por %p134, %p135
      %p137 = scmp.ne.s32.totalorder %s126, %s129
      %p138 = scmp.eq.s32.totalorder %s24, 1
      %p139 = por %p137, %p138
      %p140 = scmp.ne.s32.totalorder %s129, %s130
      %p141 = scmp.eq.s32.totalorder %s24, 0
      %p142 = por %p140, %p141
      %p143 = scmp.ne.s32.totalorder %s129, %s130
      %p144 = scmp.eq.s32.totalorder %s25, 1
      %p145 = por %p143, %p144
      %p147 = scmp.ne.s32.totalorder %s130, %s146
      %p148 = scmp.eq.s32.totalorder %s25, 0
      %p149 = por %p147, %p148
      %s151 = sadd.s32 %s150, 1
      %p154 = scmp.eq.s32.totalorder %s19, 1
      %p155 = scmp.ne.s32.totalorder %s150, %s152
      %p156 = scmp.eq.s32.totalorder %s19, 0
      %p157 = por %p155, %p156
      %p158 = scmp.ne.s32.totalorder %s150, %s152
      %p159 = scmp.eq.s32.totalorder %s24, 1
      %p160 = por %p158, %p159
      %p161 = scmp.ne.s32.totalorder %s152, %s153
      %p162 = scmp.eq.s32.totalorder %s24, 0
      %p163 = por %p161, %p162
      %p164 = scmp.ne.s32.totalorder %s152, %s153
      %p165 = scmp.eq.s32.totalorder %s25, 1
      %p166 = por %p164, %p165
      %p168 = scmp.ne.s32.totalorder %s153, %s167
      %p169 = scmp.eq.s32.totalorder %s25, 0
      %p170 = por %p168, %p169
      %s171 = ssub.s32 %s26, %s38
      %p172 = scmp.eq.s32.totalorder %s171, 0
      %s174 = sadd.s32 %s173, 1
      %s175 = scalar_select %p172, %s173, %s174
      %p178 = pneg %p172
      %p179 = scmp.eq.s32.totalorder %s19, 1
      %p180 = por %p178, %p179
      %p181 = scmp.ne.s32.totalorder %s173, %s176
      %p182 = scmp.eq.s32.totalorder %s19, 0
      %p183 = por %p181, %p182
      %p184 = scmp.ne.s32.totalorder %s173, %s176
      %p185 = scmp.eq.s32.totalorder %s24, 1
      %p186 = por %p184, %p185
      %p187 = scmp.ne.s32.totalorder %s176, %s177
      %p188 = scmp.eq.s32.totalorder %s24, 0
      %p189 = por %p187, %p188
      %p190 = scmp.ne.s32.totalorder %s176, %s177
      %p191 = scmp.eq.s32.totalorder %s25, 1
      %p192 = por %p190, %p191
      %p194 = scmp.ne.s32.totalorder %s177, %s193
      %p195 = scmp.eq.s32.totalorder %s25, 0
      %p196 = por %p194, %p195
      %p197 = scmp.le.s32.totalorder 1, %s19
      %p198 = scmp.lt.s32.totalorder %s19, 3
      %p199 = pnand %p197, %p198
      %p200 = pneg %p199
      // Predicated region
      $region9: #{tpu_custom_call.1} parent=5 // pred_check
        _
      $region10: #{tpu_custom_call.1} parent=5 // pred_check_branch
        %202 = sbr.rel (%p199) target = $region12
      $region11: #{tpu_custom_call.1} parent=5 // pred_region
        %s203 = ssub.s32 %s19, 1
        // Predicated region
        $region13: #{tpu_custom_call.1} parent=11 // pred_check
          %p204 = pneg %p52
        $region14: #{tpu_custom_call.1} parent=11 // pred_check_branch
          %206 = sbr.rel (%p204) target = $region16
        $region15: #{tpu_custom_call.1} parent=11 // pred_region
          %s208 = ssub.s32 128, 128
          %209 = vsyncadd [#allocation3], %s208
          %s210 = sshll.u32 [#allocation2], 4
          %s211 = int_to_ptr.vmem [resolvable:$true] %s210
          %216 = dma.hbm_to_vmem [thread:$0]  %s0, 128, %s211, [#allocation3], 64, 64, 4
        $region16: #{tpu_custom_call.1} parent=11 // pred_fallthru
          _
        // Predicated region
        $region17: #{tpu_custom_call.1} parent=11 // pred_check
          %p217 = pneg %p163
        $region18: #{tpu_custom_call.1} parent=11 // pred_check_branch
          %219 = sbr.rel (%p217) target = $region20
        $region19: #{tpu_custom_call.1} parent=11 // pred_region
          _
        $region20: #{tpu_custom_call.1} parent=11 // pred_fallthru
          _
      $region12: #{tpu_custom_call.1} parent=5 // pred_fallthru
        _
      %p220 = scmp.lt.s32.totalorder %s19, 2
      // Predicated region
      $region21: #{tpu_custom_call.1} parent=5 // pred_check
        %p221 = pneg %p220
      $region22: #{tpu_custom_call.1} parent=5 // pred_check_branch
        %223 = sbr.rel (%p221) target = $region24
      $region23: #{tpu_custom_call.1} parent=5 // pred_region
        // Predicated region
        $region25: #{tpu_custom_call.1} parent=23 // pred_check
          %p224 = pneg %p76
        $region26: #{tpu_custom_call.1} parent=23 // pred_check_branch
          %226 = sbr.rel (%p224) target = $region28
        $region27: #{tpu_custom_call.1} parent=23 // pred_region
          %s227 = sand.u32 %s19, 1
          %s228 = scalar_lea.sflag [#allocation6], %s227
          %s229 = sand.u32 %s66, 1
          %s230 = smul.addr %s229, 64
          %s231 = scalar_lea.vmem [#allocation5], %s230
          %s232 = smul.u32 %s26, 2
          %s233 = sadd.s32 %s232, %s27
          %s235 = ssub.s32 1024, 1024
          %236 = vsyncadd %s228, %s235
          %s237 = smul.addr %s233, 64
          %s238 = scalar_lea.hbm %s1, %s237
          %s239 = sshll.u32 %s231, 4
          %s240 = int_to_ptr.vmem [resolvable:$true] %s239
          %245 = dma.hbm_to_vmem [thread:$0]  %s238, 1024, %s240, %s228, 128, 64, 4
        $region28: #{tpu_custom_call.1} parent=23 // pred_fallthru
          _
        // Predicated region
        $region29: #{tpu_custom_call.1} parent=23 // pred_check
          %p246 = pneg %p106
        $region30: #{tpu_custom_call.1} parent=23 // pred_check_branch
          %248 = sbr.rel (%p246) target = $region32
        $region31: #{tpu_custom_call.1} parent=23 // pred_region
          %s249 = sand.u32 %s19, 1
          %s250 = scalar_lea.sflag [#allocation6], %s249
          %s251 = sand.u32 %s96, 1
          %s252 = smul.addr %s251, 2
          %s253 = scalar_lea.vmem [#allocation7], %s252
          %s254 = smul.u32 %s26, 2
          %s255 = sadd.s32 %s254, %s27
          %s257 = ssub.s32 32, 32
          %258 = vsyncadd %s250, %s257
          %s259 = smul.addr %s255, 32
          %s260 = scalar_lea.hbm %s2, %s259
          %s262 = sshll.u32 %s253, 4
          %s263 = int_to_ptr.vmem [resolvable:$true] %s262
          %265 = dma.hbm_to_vmem [thread:$0]  %s260, 32, %s263, %s250
        $region32: #{tpu_custom_call.1} parent=23 // pred_fallthru
          _
        // Predicated region
        $region33: #{tpu_custom_call.1} parent=23 // pred_check
          %p266 = pneg %p136
        $region34: #{tpu_custom_call.1} parent=23 // pred_check_branch
          %268 = sbr.rel (%p266) target = $region36
        $region35: #{tpu_custom_call.1} parent=23 // pred_region
          %s269 = sand.u32 %s126, 1
          %s270 = scalar_lea.sflag [#allocation9], %s269
          %s271 = sand.u32 %s126, 1
          %s272 = smul.addr %s271, 64
          %s273 = scalar_lea.vmem [#allocation8], %s272
          %s274 = smul.u32 %s26, 2
          %s275 = sadd.s32 %s274, %s27
          %s276 = smul.u32 16, %s275
          %s278 = ssub.s32 1024, 1024
          %279 = vsyncadd %s270, %s278
          %s280 = smul.addr %s276, 64
          %s281 = scalar_lea.hbm %s3, %s280
          %s282 = sshll.u32 %s273, 4
          %s283 = int_to_ptr.vmem [resolvable:$true] %s282
          %288 = dma.hbm_to_vmem [thread:$0]  %s281, 1024, %s283, %s270, 64, 64, 4
        $region36: #{tpu_custom_call.1} parent=23 // pred_fallthru
          _
      $region24: #{tpu_custom_call.1} parent=5 // pred_fallthru
        _
      %p289 = scmp.le.s32.totalorder 1, %s19
      %p290 = scmp.lt.s32.totalorder %s19, 3
      %p291 = pnand %p289, %p290
      %p292 = pneg %p291
      // Predicated region
      $region37: #{tpu_custom_call.1} parent=5 // pred_check
        _
      $region38: #{tpu_custom_call.1} parent=5 // pred_check_branch
        %294 = sbr.rel (%p291) target = $region40
      $region39: #{tpu_custom_call.1} parent=5 // pred_region
        %s295 = ssub.s32 %s19, 1
        // Predicated region
        $region41: #{tpu_custom_call.1} parent=39 // pred_check
          %p296 = pneg %p52
        $region42: #{tpu_custom_call.1} parent=39 // pred_check_branch
          %298 = sbr.rel (%p296) target = $region44
        $region43: #{tpu_custom_call.1} parent=39 // pred_region
          %299 = dma.done [#allocation3], 128
        $region44: #{tpu_custom_call.1} parent=39 // pred_fallthru
          _
        %s300 = sand.u32 %s24, 1
        %s301 = scalar_lea.sflag [#allocation6], %s300
        %s302 = sand.u32 %s69, 1
        %s303 = smul.addr %s302, 64
        %s304 = scalar_lea.vmem [#allocation5], %s303
        // Predicated region
        $region45: #{tpu_custom_call.1} parent=39 // pred_check
          %p305 = pneg %p82
        $region46: #{tpu_custom_call.1} parent=39 // pred_check_branch
          %307 = sbr.rel (%p305) target = $region48
        $region47: #{tpu_custom_call.1} parent=39 // pred_region
          %308 = dma.done %s301, 1024
        $region48: #{tpu_custom_call.1} parent=39 // pred_fallthru
          _
        %s309 = sand.u32 %s24, 1
        %s310 = scalar_lea.sflag [#allocation6], %s309
        %s311 = sand.u32 %s99, 1
        %s312 = smul.addr %s311, 2
        %s313 = scalar_lea.vmem [#allocation7], %s312
        // Predicated region
        $region49: #{tpu_custom_call.1} parent=39 // pred_check
          %p314 = pneg %p112
        $region50: #{tpu_custom_call.1} parent=39 // pred_check_branch
          %316 = sbr.rel (%p314) target = $region52
        $region51: #{tpu_custom_call.1} parent=39 // pred_region
          %317 = dma.done %s310, 32
        $region52: #{tpu_custom_call.1} parent=39 // pred_fallthru
          _
        %s318 = sand.u32 %s129, 1
        %s319 = scalar_lea.sflag [#allocation9], %s318
        %s320 = sand.u32 %s129, 1
        %s321 = smul.addr %s320, 64
        %s322 = scalar_lea.vmem [#allocation8], %s321
        // Predicated region
        $region53: #{tpu_custom_call.1} parent=39 // pred_check
          %p323 = pneg %p142
        $region54: #{tpu_custom_call.1} parent=39 // pred_check_branch
          %325 = sbr.rel (%p323) target = $region56
        $region55: #{tpu_custom_call.1} parent=39 // pred_region
          %326 = dma.done %s319, 1024
        $region56: #{tpu_custom_call.1} parent=39 // pred_fallthru
          _
        %p327 = pneg %p52
        %p328 = pneg %p49
        %s329 = sand.u32 %s24, 1
        %s330 = scalar_lea.sflag [#allocation6], %s329
        %s331 = sand.u32 %s69, 1
        %s332 = smul.addr %s331, 64
        %s333 = scalar_lea.vmem [#allocation5], %s332
        %p334 = pneg %p82
        %p335 = pneg %p79
        %s336 = sand.u32 %s24, 1
        %s337 = scalar_lea.sflag [#allocation6], %s336
        %s338 = sand.u32 %s99, 1
        %s339 = smul.addr %s338, 2
        %s340 = scalar_lea.vmem [#allocation7], %s339
        %p341 = pneg %p112
        %p342 = pneg %p109
        %s343 = sand.u32 %s129, 1
        %s344 = scalar_lea.sflag [#allocation9], %s343
        %s345 = sand.u32 %s129, 1
        %s346 = smul.addr %s345, 64
        %s347 = scalar_lea.vmem [#allocation8], %s346
        %p348 = pneg %p142
        %p349 = pneg %p139
        %p350 = pneg %p163
        %p351 = pneg %p160
        %p352 = pneg %p189
        %p353 = pneg %p186
        %s354 = smul.u32 %s28, 2
        %s355 = sadd.s32 %s354, %s29
        %s356 = smul.u32 %s28, 2
        %s357 = sadd.s32 %s356, %s29
        %s358 = smul.u32 %s28, 2
        %s359 = sadd.s32 %s358, %s29
        %s360 = smul.u32 16, %s359
        %p362 = scmp.eq.s32.totalorder %s29, 0
        // Predicated region
        $region57: #{tpu_custom_call.1} parent=39 // pred_check
          %p363 = pneg %p362
        $region58: #{tpu_custom_call.1} parent=39 // pred_check_branch
          %365 = sbr.rel (%p363) target = $region60
        $region59: #{tpu_custom_call.1} parent=39 // pred_region
          %v366 = vld [vmem:[%s4] sm:$0x1]
          %p367 = scmp.eq.s32.totalorder %s28, 0
          %s368 = scalar_select %p367, 1, 0
          %s369 = scvt.s32.f32 %s368
          %v370 = vstv %s369
          %v371 = vmul.f32 %v366, %v370
          %v373 = vlaneseq
          %v374 = vshrl.u32 %v373, 7
          %v375 = vsub.s32 0, %v374
          %v376 = vrot.slane %v371, %v375
          %378 = vst [vmem:[#allocation10] sm:$0xff] %v376
          %379 = vst [vmem:[#allocation10 + $0x8] sm:$0xff] %v376
        $region60: #{tpu_custom_call.1} parent=39 // pred_fallthru
          _
        %v380 = vld [vmem:[#allocation2] sm:$0xf]
        %v381 = vld [vmem:[#allocation2 + $0x4] sm:$0xf]
        %v382 = vld [vmem:[%s304] sm:$0xf]
        %v383 = vld [vmem:[%s304 + $0x4] sm:$0xf]
        %v384 = vld [vmem:[%s304 + $0x8] sm:$0xf]
        %v385 = vld [vmem:[%s304 + $0xc] sm:$0xf]
        %v386 = vld [vmem:[%s304 + $0x10] sm:$0xf]
        %v387 = vld [vmem:[%s304 + $0x14] sm:$0xf]
        %v388 = vld [vmem:[%s304 + $0x18] sm:$0xf]
        %v389 = vld [vmem:[%s304 + $0x1c] sm:$0xf]
        %v390 = vld [vmem:[%s304 + $0x20] sm:$0xf]
        %v391 = vld [vmem:[%s304 + $0x24] sm:$0xf]
        %v392 = vld [vmem:[%s304 + $0x28] sm:$0xf]
        %v393 = vld [vmem:[%s304 + $0x2c] sm:$0xf]
        %v394 = vld [vmem:[%s304 + $0x30] sm:$0xf]
        %v395 = vld [vmem:[%s304 + $0x34] sm:$0xf]
        %v396 = vld [vmem:[%s304 + $0x38] sm:$0xf]
        %v397 = vld [vmem:[%s304 + $0x3c] sm:$0xf]
        %v400 = vunpack.c.l.b16 %v380
        %v401 = vunpack.c.l.b16 %v381
        %v402 = vpack.c.b16 %v401, %v400
        %v420 = vunpack.c.l.b16 %v382
        %v421 = vunpack.c.l.b16 %v383
        %v422 = vunpack.c.l.b16 %v384
        %v423 = vunpack.c.l.b16 %v385
        %v424 = vunpack.c.l.b16 %v386
        %v425 = vunpack.c.l.b16 %v387
        %v426 = vunpack.c.l.b16 %v388
        %v427 = vunpack.c.l.b16 %v389
        %v428 = vunpack.c.l.b16 %v390
        %v429 = vunpack.c.l.b16 %v391
        %v430 = vunpack.c.l.b16 %v392
        %v431 = vunpack.c.l.b16 %v393
        %v432 = vunpack.c.l.b16 %v394
        %v433 = vunpack.c.l.b16 %v395
        %v434 = vunpack.c.l.b16 %v396
        %v435 = vunpack.c.l.b16 %v397
        %v436 = vpack.c.b16 %v421, %v420
        %v437 = vpack.c.b16 %v423, %v422
        %v438 = vpack.c.b16 %v425, %v424
        %v439 = vpack.c.b16 %v427, %v426
        %v440 = vpack.c.b16 %v429, %v428
        %v441 = vpack.c.b16 %v431, %v430
        %v442 = vpack.c.b16 %v433, %v432
        %v443 = vpack.c.b16 %v435, %v434
        %452 = vmatprep.subr.bf16.mxu0 0
        %453 = vmatpush1.bf16.msra.mxu0 %v443
        %454 = vmatprep.subr.bf16.mxu0 0
        %455 = vmatpush1.bf16.msra.mxu0 %v442
        %456 = vmatprep.subr.bf16.mxu0 0
        %457 = vmatpush1.bf16.msra.mxu0 %v441
        %458 = vmatprep.subr.bf16.mxu0 0
        %459 = vmatpush1.bf16.msra.mxu0 %v440
        %460 = vmatprep.subr.bf16.mxu0 0
        %461 = vmatpush1.bf16.msra.mxu0 %v439
        %462 = vmatprep.subr.bf16.mxu0 0
        %463 = vmatpush1.bf16.msra.mxu0 %v438
        %464 = vmatprep.subr.bf16.mxu0 0
        %465 = vmatpush1.bf16.msra.mxu0 %v437
        %466 = vmatprep.subr.bf16.mxu0 0
        %467 = vmatpush1.bf16.msra.mxu0 %v436
        %468 = vmatprep.subr.bf16.mxu0 0
        %469 = vmatpush2.bf16.msra.mxu0 0
        %470 = vmatprep.subr.bf16.mxu0 0
        %471 = vmatpush2.bf16.msra.mxu0 0
        %472 = vmatprep.subr.bf16.mxu0 0
        %473 = vmatpush2.bf16.msra.mxu0 0
        %474 = vmatprep.subr.bf16.mxu0 0
        %475 = vmatpush2.bf16.msra.mxu0 0
        %476 = vmatprep.subr.bf16.mxu0 0
        %477 = vmatpush2.bf16.msra.mxu0 0
        %478 = vmatprep.subr.bf16.mxu0 0
        %479 = vmatpush2.bf16.msra.mxu0 0
        %480 = vmatprep.subr.bf16.mxu0 0
        %481 = vmatpush2.bf16.msra.mxu0 0
        %482 = vmatprep.subr.bf16.mxu0 0
        %483 = vmatpush2.bf16.msra.mxu0 0
        %484 = vmatprep.mubr.bf16.mxu0 0
        %485 = vmatmul.mubr.bf16.gmra.mxu0 %v402
        %v486 = vpop.f32.mrf.mxu0
        %v487 = vadd.f32 0.0, %v486
        %v488 = vpop.f32.mrf.mxu0
        %v489 = vpop.f32.mrf.mxu0
        %v490 = vadd.f32 0.0, %v489
        %v491 = vpop.f32.mrf.mxu0
        %492 = vdwg.mxu0
        %v493 = vadd.f32 %v487, %v490
        %v494 = vrot.slane %v493, 4
        %v495 = vadd.f32 %v493, %v494
        %v496 = vrot.slane %v495, 2
        %v497 = vadd.f32 %v495, %v496
        %v498 = vrot.slane %v497, 1
        %v499 = vadd.f32 %v497, %v498
        %v500 = vmul.f32 %v499, 0.0625
        %v501 = vmul.f32 %v487, %v487
        %v502 = vmul.f32 %v490, %v490
        %v503 = vadd.f32 %v501, %v502
        %v504 = vrot.slane %v503, 4
        %v505 = vadd.f32 %v503, %v504
        %v506 = vrot.slane %v505, 2
        %v507 = vadd.f32 %v505, %v506
        %v508 = vrot.slane %v507, 1
        %v509 = vadd.f32 %v507, %v508
        %v510 = vmul.f32 %v509, 0.0625
        %v511 = vmul.f32 %v500, %v500
        %v512 = vsub.f32 %v510, %v511
        %v513 = vld [vmem:[%s313] sm:$0x1]
        %v514 = vld [vmem:[%s313 + $0x1] sm:$0x1]
        %v515 = vadd.f32 %v512, 1e-05
        %v516 = vrsqrt.pop %v515
        %v517 = vmul.f32 %v513, %v516
        %v518 = vmul.f32 %v500, %v517
        %v519 = vsub.f32 %v514, %v518
        %v520 = vlaneseq
        %v521 = vshrl.u32 %v520, 7
        %v522 = vsub.s32 0, %v521
        %v523 = vrot.slane %v517, %v522
        %v524 = vmul.f32 %v487, %v523
        %v525 = vmul.f32 %v490, %v523
        %v526 = vlaneseq
        %v527 = vshrl.u32 %v526, 7
        %v528 = vsub.s32 0, %v527
        %v529 = vrot.slane %v519, %v528
        %v530 = vadd.f32 %v524, %v529
        %v531 = vadd.f32 %v525, %v529
        %v532 = vmax.f32 %v530, 0.0
        %v533 = vmax.f32 %v531, 0.0
        %v534 = vld [vmem:[#allocation10] sm:$0xff]
        %v535 = vld [vmem:[#allocation10 + $0x8] sm:$0xff]
        %v536 = vpack.c.bf16 %v533, %v532
        %v537 = vld [vmem:[%s322] sm:$0xf]
        %v538 = vld [vmem:[%s322 + $0x4] sm:$0xf]
        %v539 = vld [vmem:[%s322 + $0x8] sm:$0xf]
        %v540 = vld [vmem:[%s322 + $0xc] sm:$0xf]
        %v541 = vld [vmem:[%s322 + $0x10] sm:$0xf]
        %v542 = vld [vmem:[%s322 + $0x14] sm:$0xf]
        %v543 = vld [vmem:[%s322 + $0x18] sm:$0xf]
        %v544 = vld [vmem:[%s322 + $0x1c] sm:$0xf]
        %v545 = vld [vmem:[%s322 + $0x20] sm:$0xf]
        %v546 = vld [vmem:[%s322 + $0x24] sm:$0xf]
        %v547 = vld [vmem:[%s322 + $0x28] sm:$0xf]
        %v548 = vld [vmem:[%s322 + $0x2c] sm:$0xf]
        %v549 = vld [vmem:[%s322 + $0x30] sm:$0xf]
        %v550 = vld [vmem:[%s322 + $0x34] sm:$0xf]
        %v551 = vld [vmem:[%s322 + $0x38] sm:$0xf]
        %v552 = vld [vmem:[%s322 + $0x3c] sm:$0xf]
        %v569 = vunpack.c.l.b16 %v537
        %v570 = vunpack.c.l.b16 %v538
        %v571 = vunpack.c.l.b16 %v539
        %v572 = vunpack.c.l.b16 %v540
        %v573 = vunpack.c.l.b16 %v541
        %v574 = vunpack.c.l.b16 %v542
        %v575 = vunpack.c.l.b16 %v543
        %v576 = vunpack.c.l.b16 %v544
        %v577 = vunpack.c.l.b16 %v545
        %v578 = vunpack.c.l.b16 %v546
        %v579 = vunpack.c.l.b16 %v547
        %v580 = vunpack.c.l.b16 %v548
        %v581 = vunpack.c.l.b16 %v549
        %v582 = vunpack.c.l.b16 %v550
        %v583 = vunpack.c.l.b16 %v551
        %v584 = vunpack.c.l.b16 %v552
        %v585 = vpack.c.b16 %v570, %v569
        %v586 = vpack.c.b16 %v572, %v571
        %v587 = vpack.c.b16 %v574, %v573
        %v588 = vpack.c.b16 %v576, %v575
        %v589 = vpack.c.b16 %v578, %v577
        %v590 = vpack.c.b16 %v580, %v579
        %v591 = vpack.c.b16 %v582, %v581
        %v592 = vpack.c.b16 %v584, %v583
        %601 = vmatprep.subr.bf16.mxu0 0
        %602 = vmatpush1.bf16.msra.mxu0 %v592
        %603 = vmatprep.subr.bf16.mxu0 0
        %604 = vmatpush1.bf16.msra.mxu0 %v591
        %605 = vmatprep.subr.bf16.mxu0 0
        %606 = vmatpush1.bf16.msra.mxu0 %v590
        %607 = vmatprep.subr.bf16.mxu0 0
        %608 = vmatpush1.bf16.msra.mxu0 %v589
        %609 = vmatprep.subr.bf16.mxu0 0
        %610 = vmatpush1.bf16.msra.mxu0 %v588
        %611 = vmatprep.subr.bf16.mxu0 0
        %612 = vmatpush1.bf16.msra.mxu0 %v587
        %613 = vmatprep.subr.bf16.mxu0 0
        %614 = vmatpush1.bf16.msra.mxu0 %v586
        %615 = vmatprep.subr.bf16.mxu0 0
        %616 = vmatpush1.bf16.msra.mxu0 %v585
        %617 = vmatprep.subr.bf16.mxu0 0
        %618 = vmatpush2.bf16.msra.mxu0 0
        %619 = vmatprep.subr.bf16.mxu0 0
        %620 = vmatpush2.bf16.msra.mxu0 0
        %621 = vmatprep.subr.bf16.mxu0 0
        %622 = vmatpush2.bf16.msra.mxu0 0
        %623 = vmatprep.subr.bf16.mxu0 0
        %624 = vmatpush2.bf16.msra.mxu0 0
        %625 = vmatprep.subr.bf16.mxu0 0
        %626 = vmatpush2.bf16.msra.mxu0 0
        %627 = vmatprep.subr.bf16.mxu0 0
        %628 = vmatpush2.bf16.msra.mxu0 0
        %629 = vmatprep.subr.bf16.mxu0 0
        %630 = vmatpush2.bf16.msra.mxu0 0
        %631 = vmatprep.subr.bf16.mxu0 0
        %632 = vmatpush2.bf16.msra.mxu0 0
        %633 = vmatprep.mubr.bf16.mxu0 0
        %634 = vmatmul.mubr.bf16.gmra.mxu0 %v536
        %v635 = vpop.f32.mrf.mxu0
        %v636 = vadd.f32 0.0, %v635
        %v637 = vpop.f32.mrf.mxu0
        %v638 = vpop.f32.mrf.mxu0
        %v639 = vadd.f32 0.0, %v638
        %v640 = vpop.f32.mrf.mxu0
        %641 = vdwg.mxu0
        %v642 = vadd.f32 %v534, %v636
        %v643 = vadd.f32 %v535, %v639
        %644 = vst [vmem:[#allocation10] sm:$0xff] %v642
        %645 = vst [vmem:[#allocation10 + $0x8] sm:$0xff] %v643
        // Predicated region
        $region61: #{tpu_custom_call.1} parent=39 // pred_check
          %p646 = pneg %p186
        $region62: #{tpu_custom_call.1} parent=39 // pred_check_branch
          %648 = sbr.rel (%p646) target = $region64
        $region63: #{tpu_custom_call.1} parent=39 // pred_region
          %s650 = ssub.s32 256, 256
          %651 = vsyncadd [#allocation4], %s650
          %s652 = smul.addr %s28, 2
          %s653 = smul.addr %s652, 128
          %s654 = scalar_lea.hbm %s5, %s653
          %s655 = sshll.u32 [#allocation10], 4
          %s656 = int_to_ptr.vmem [resolvable:$true] %s655
          %661 = dma.vmem_to_hbm [thread:$0]  %s656, 256, %s654, [#allocation4], 128, 128, 8
        $region64: #{tpu_custom_call.1} parent=39 // pred_fallthru
          _
        // Predicated region
        $region65: #{tpu_custom_call.1} parent=39 // pred_check
          %p662 = pneg %p186
        $region66: #{tpu_custom_call.1} parent=39 // pred_check_branch
          %664 = sbr.rel (%p662) target = $region68
        $region67: #{tpu_custom_call.1} parent=39 // pred_region
          %665 = dma.done [#allocation4], 256
        $region68: #{tpu_custom_call.1} parent=39 // pred_fallthru
          _
      $region40: #{tpu_custom_call.1} parent=5 // pred_fallthru
        _
      %p666 = scmp.le.s32.totalorder 2, %s19
      // Predicated region
      $region69: #{tpu_custom_call.1} parent=5 // pred_check
        %p667 = pneg %p666
      $region70: #{tpu_custom_call.1} parent=5 // pred_check_branch
        %669 = sbr.rel (%p667) target = $region72
      $region71: #{tpu_custom_call.1} parent=5 // pred_region
        %s670 = ssub.s32 %s19, 2
      $region72: #{tpu_custom_call.1} parent=5 // pred_fallthru
        _
    $region6: #{tpu_custom_call.1} parent=1 // loop_footer
      %s23 = sadd.s32 1, %s19
    $region7: #{tpu_custom_call.1} parent=1 // loop_footer_branch
      %18 = sbr.rel target = $region3
    $region8: #{tpu_custom_call.1} parent=1 // loop_exit
      _
    %671 = vsyncpa [#allocation3], 1
    %s672 = scalar_lea.sflag [#allocation3], 1
    %673 = vsyncpa %s672, 1
    %674 = vsyncpa [#allocation6], 1
    %s675 = scalar_lea.sflag [#allocation6], 1
    %676 = vsyncpa %s675, 1
    %677 = vsyncpa [#allocation9], 1
    %s678 = scalar_lea.sflag [#allocation9], 1
    %679 = vsyncpa %s678, 1
    %680 = vsyncpa [#allocation4], 1
    %s681 = scalar_lea.sflag [#allocation4], 1
    %682 = vsyncpa %s681, 1

</llo_original>
